<compile_context>
chip_gen: v7x
topology: tpu7x:2x2x1
jax: 0.10.0
libtpu: 0.0.40
codegen_flags: <defaults>
</compile_context>

<pallas_src>
import math

import jax
import jax.numpy as jnp
from jax.experimental import pallas as pl
from jax.experimental.pallas import tpu as pltpu


def _drop_path_kernel(scale_ref, x_ref, o_ref):
    # scale_ref: (B_TILE, 1) or (1, 1, 1) per-sample scale (0 or 1/keep_prob),
    #            already in x.dtype.
    # x_ref/o_ref: (B_TILE, F) or (1, R_TILE, LANE_W) activation block.
    o_ref[...] = x_ref[...] * scale_ref[...]


# ~2 MiB per block: large enough to sit near the HBM roofline on v5e/v6e/v7x,
# small enough that in+out double-buffering (~8 MiB) fits every generation's
# default scoped-VMEM limit (16 MiB on v5e, 32 MiB on v6e/v7x).
_BLOCK_BUDGET_BYTES = 2 * 1024 * 1024
_LANES = 128


def drop_path_pallas(x, drop_prob: float, key, training: bool = True,
                     *, donate_input: bool = False,
                     block_budget_bytes: int = _BLOCK_BUDGET_BYTES):
    """Pallas implementation of timm/mmcv drop_path (forward pass)."""
    if drop_prob == 0.0 or not training:
        return x
    if drop_prob >= 1.0:
        # keep_prob == 0: every path is dropped (avoid inf * 0 -> NaN).
        return jnp.zeros_like(x)

    keep_prob = 1.0 - drop_prob
    N = x.shape[0]
    F = math.prod(x.shape[1:]) if x.ndim > 1 else 1
    itemsize = x.dtype.itemsize
    sample_bytes = F * itemsize

    # Per-sample scale (O(N) scalars), cast once to x.dtype so the kernel
    # runs entirely in the activation's native dtype.
    u = jax.random.uniform(key, (N,), dtype=jnp.float32)
    scale_vec = (jnp.floor(keep_prob + u) / keep_prob).astype(x.dtype)

    # Aliasing the activation input (index 1: inputs are (scale, x)) to the
    # output only pays when the caller actually donates the buffer; keep it
    # opt-in so eager callers that still need x are not forced into a copy.
    io_alias = {1: 0} if donate_input else {}

    # ---------------- case A: pack whole samples per block -----------------
    # (sublane axis = samples, lane axis = all features; no padding needed.)
    if N * sample_bytes <= block_budget_bytes:
        b_tile = N
    elif sample_bytes > 0 and block_budget_bytes // sample_bytes >= 8:
        b_tile = (block_budget_bytes // sample_bytes) // 8 * 8   # multiple of 8, < N
    else:
        b_tile = 0                                               # fall through to case B

    if b_tile:
        x2 = x.reshape(N, F)
        scale2 = scale_vec.reshape(N, 1)
        x_spec = pl.BlockSpec((b_tile, F), lambda b: (b, 0))
        s_spec = pl.BlockSpec((b_tile, 1), lambda b: (b, 0))
        out2 = pl.pallas_call(
            _drop_path_kernel,
            out_shape=jax.ShapeDtypeStruct((N, F), x.dtype),
            grid=(pl.cdiv(N, b_tile),),
            in_specs=[s_spec, x_spec],
            out_specs=x_spec,
            input_output_aliases=io_alias,
            compiler_params=pltpu.CompilerParams(
                dimension_semantics=("parallel",)),
        )(scale2, x2)
        return out2.reshape(x.shape)

    # ---------------- case B: large samples, tile rows within a sample -----
    Fp = ((F + _LANES - 1) // _LANES) * _LANES
    x2 = x.reshape(N, F)
    if Fp != F:                      # rare: only when F is not a multiple of 128
        x2 = jnp.pad(x2, ((0, 0), (0, Fp - F)))

    lane_w = _LANES                  # widest lane-dense last dim dividing Fp
    for cand in (2048, 1024, 512, 256):
        if Fp % cand == 0:
            lane_w = cand
            break
    rows = Fp // lane_w
    x3 = x2.reshape(N, rows, lane_w)
    scale3 = scale_vec.reshape(N, 1, 1)

    r_target = max(1, block_budget_bytes // (lane_w * itemsize))
    if r_target >= rows:
        r_tile = rows                                  # full dim -> exempt from %8 rule
    else:
        r_tile = min(max(8, (r_target // 8) * 8), rows)

    x_spec = pl.BlockSpec((1, r_tile, lane_w), lambda b, r: (b, r, 0))
    s_spec = pl.BlockSpec((1, 1, 1), lambda b, r: (b, 0, 0))
    out3 = pl.pallas_call(
        _drop_path_kernel,
        out_shape=jax.ShapeDtypeStruct((N, rows, lane_w), x.dtype),
        grid=(N, pl.cdiv(rows, r_tile)),
        in_specs=[s_spec, x_spec],
        out_specs=x_spec,
        input_output_aliases=io_alias,
        compiler_params=pltpu.CompilerParams(
            dimension_semantics=("parallel", "parallel")),
    )(scale3, x3)

    out = out3.reshape(N, Fp)
    if Fp != F:
        out = out[:, :F]
    return out.reshape(x.shape)


class DropPath:
    """JAX/Pallas counterpart of mmcv DropPath (drop_prob default 0.1)."""

    def __init__(self, drop_prob: float = 0.1):
        self.drop_prob = drop_prob
        self.training = True

    def __call__(self, x, key):
        return drop_path_pallas(x, self.drop_prob, key, self.training)


if __name__ == "__main__":
    key = jax.random.PRNGKey(0)
    kx, kmask = jax.random.split(key)

    # --- small NCHW input: packed-samples path (case A) ---------------------
    x = jax.random.normal(kx, (2, 4, 16, 16), dtype=jnp.float32)
    module = DropPath(drop_prob=0.1)
    out = jax.block_until_ready(module(x, kmask))

    keep_prob = 1.0 - module.drop_prob
    u = jax.random.uniform(kmask, (x.shape[0],), dtype=jnp.float32)
    mask = jnp.floor(keep_prob + u).reshape(-1, 1, 1, 1)
    ref = x / keep_prob * mask
    assert out.shape == x.shape and out.dtype == x.dtype
    assert jnp.allclose(out, ref, atol=1e-6, rtol=1e-5)

    # --- row-tiled path (case B), forced via a tiny block budget ------------
    xb = jax.random.normal(kx, (2, 32, 32, 32), dtype=jnp.float32)
    outb = jax.block_until_ready(
        drop_path_pallas(xb, 0.5, kmask, True, block_budget_bytes=32 * 1024))
    ub = jax.random.uniform(kmask, (xb.shape[0],), dtype=jnp.float32)
    maskb = jnp.floor(0.5 + ub).reshape(-1, 1, 1, 1)
    refb = xb / 0.5 * maskb
    assert outb.shape == xb.shape and outb.dtype == xb.dtype
    assert jnp.allclose(outb, refb, atol=1e-6, rtol=1e-5)

    # --- bf16 native-dtype path ---------------------------------------------
    xh = jax.random.normal(kx, (2, 4, 16, 16), dtype=jnp.bfloat16)
    outh = jax.block_until_ready(drop_path_pallas(xh, 0.1, kmask, True))
    refh = xh.astype(jnp.float32) / keep_prob * mask
    assert outh.dtype == jnp.bfloat16
    assert jnp.allclose(outh.astype(jnp.float32), refh, atol=5e-2, rtol=5e-2)

    # --- eval-mode / p=0 identity, p=1 all-dropped --------------------------
    module.training = False
    assert jnp.array_equal(module(x, kmask), x)
    module.training = True
    assert jnp.array_equal(drop_path_pallas(x, 0.0, kmask, True), x)
    assert jnp.array_equal(drop_path_pallas(x, 1.0, kmask, True),
                           jnp.zeros_like(x))

    print("KERNEL_OK")
</pallas_src>

<mosaic_0001>
module attributes {stable_mosaic.version = 11 : i64} {
  func.func @_drop_path_kernel(%arg0: i32, %arg1: memref<2x1xf32, #tpu.memory_space<vmem>>, %arg2: memref<2x1024xf32, #tpu.memory_space<vmem>>, %arg3: memref<2x1024xf32, #tpu.memory_space<vmem>>) attributes {dimension_semantics = [#tpu.dimension_semantics<parallel>], iteration_bounds = array<i64: 1>, scalar_prefetch = 0 : i64, scratch_operands = 0 : i64, tpu.core_type = #tpu.core_type<tc>, window_params = [{transform_indices = @transform_0, window_bounds = array<i64: 2, 1>}, {transform_indices = @transform_1, window_bounds = array<i64: 2, 1024>}, {transform_indices = @transform_2, window_bounds = array<i64: 2, 1024>}]} {
    %c0 = arith.constant 0 : index
    %c0_0 = arith.constant 0 : index
    %0 = vector.load %arg2[%c0, %c0_0] : memref<2x1024xf32, #tpu.memory_space<vmem>>, vector<2x1024xf32>
    %c0_1 = arith.constant 0 : index
    %c0_2 = arith.constant 0 : index
    %1 = vector.load %arg1[%c0_1, %c0_2] : memref<2x1xf32, #tpu.memory_space<vmem>>, vector<2x1xf32>
    %2 = vector.broadcast %1 : vector<2x1xf32> to vector<2x1024xf32>
    %3 = arith.mulf %0, %2 : vector<2x1024xf32>
    %c0_3 = arith.constant 0 : index
    %c0_4 = arith.constant 0 : index
    %4 = vector.load %arg3[%c0_3, %c0_4] : memref<2x1024xf32, #tpu.memory_space<vmem>>, vector<2x1024xf32>
    tpu.vector_store %arg3[%c0_3, %c0_4], %3 {strides = array<i32>} : memref<2x1024xf32, #tpu.memory_space<vmem>>, vector<2x1024xf32>,
    return
  }
  func.func @transform_0(%arg0: i32) -> (i32, i32) {
    %c0_i32 = arith.constant 0 : i32
    %c0_i32_0 = arith.constant 0 : i32
    return %arg0, %c0_i32 : i32, i32
  }
  func.func @transform_1(%arg0: i32) -> (i32, i32) {
    %c0_i32 = arith.constant 0 : i32
    %c0_i32_0 = arith.constant 0 : i32
    return %arg0, %c0_i32 : i32, i32
  }
  func.func @transform_2(%arg0: i32) -> (i32, i32) {
    %c0_i32 = arith.constant 0 : i32
    %c0_i32_0 = arith.constant 0 : i32
    return %arg0, %c0_i32 : i32, i32
  }
}

</mosaic_0001>

<llo_original>
// kernel: tpu_custom_call.1
$region0: #{tpu_custom_call.1}
  #allocation0 [shape = 'u32[]', space=smem, size = 0x4, offset = 0x4, fixed_abs, tag = 'smem constant byte address 0x4 - core index']
  #allocation1 [shape = 'u32[144,128]{1,0:T(1,128)}', space=vmem, size = 0x12000, scoped, tag = 'internal scratch']
  %s0 = inlined_call_operand.vmem [shape: f32[2,1], index: 0, kind: input, shape index: {}]
  %s1 = inlined_call_operand.hbm [shape: f32[2,1024], index: 1, kind: input, shape index: {}]
  %s2 = inlined_call_operand.hbm [shape: f32[2,1024], index: 2, kind: output, shape index: {}]
  %s3 = sld [smem:[#allocation0]]
  $region22: #{tpu_custom_call.1} parent=0
    _
  %s5 = ssub.s32 1, %s3
  %s6 = scalar_select 0, %s5, %s3
  $region1: #{tpu_custom_call.1} parent=0
    #allocation2 [shape = 'u8[8192]{0}', space=vmem, size = 0x2000, scoped, tag = 'input window, operand 1, single buffered']
    #allocation3 [shape = 's32[1]{0}', space=sflag, size = 0x4, scoped, tag = 'scoped memory for tpu_custom_call.1']
    #allocation4 [shape = 's32[1]{0}', space=sflag, size = 0x4, scoped, tag = 'scoped memory for tpu_custom_call.1']
    #allocation5 [shape = 'u8[8192]{0}', space=vmem, size = 0x2000, scoped, tag = 'output window, operand 0, single buffered']
    %7 = vsyncpa [#allocation3], 0
    %8 = vsyncpa [#allocation4], 0
    // Predicated region
    $region2: #{tpu_custom_call.1} parent=1 // pred_check
      _
    $region3: #{tpu_custom_call.1} parent=1 // pred_check_branch
      %10 = sbr.rel (0) target = $region5
    $region4: #{tpu_custom_call.1} parent=1 // pred_region
      _
    $region5: #{tpu_custom_call.1} parent=1 // pred_fallthru
      _
    // Predicated region
    $region6: #{tpu_custom_call.1} parent=1 // pred_check
      _
    $region7: #{tpu_custom_call.1} parent=1 // pred_check_branch
      %12 = sbr.rel (0) target = $region9
    $region8: #{tpu_custom_call.1} parent=1 // pred_region
      %s14 = ssub.s32 256, 256
      %15 = vsyncadd [#allocation3], %s14
      %s17 = sshll.u32 [#allocation2], 4
      %s18 = int_to_ptr.vmem [resolvable:$true] %s17
      %20 = dma.hbm_to_vmem [thread:$0]  %s1, 256, %s18, [#allocation3]
    $region9: #{tpu_custom_call.1} parent=1 // pred_fallthru
      _
    // Predicated region
    $region10: #{tpu_custom_call.1} parent=1 // pred_check
      _
    $region11: #{tpu_custom_call.1} parent=1 // pred_check_branch
      %22 = sbr.rel (0) target = $region13
    $region12: #{tpu_custom_call.1} parent=1 // pred_region
      %23 = dma.done [#allocation3], 256
    $region13: #{tpu_custom_call.1} parent=1 // pred_fallthru
      _
    %v24 = vld [vmem:[#allocation2] sm:$0xff]
    %v25 = vld [vmem:[#allocation2 + $0x8] sm:$0xff]
    %v26 = vld [vmem:[%s0] sm:$0x3]
    %28 = vset.pattern.permute.xlu0 0
    %29 = vperm.xlu0 %28, %v26
    %v30 = vpop.permute.xlu0 %29
    %v32 = vunpack.c.l.s4 269488144
    %v33 = vunpack.c.0.s8 %v32
    %v34 = vlaneseq
    %v35 = vshrl.u32 %v34, 7
    %v36 = vsub.s32 %v33, %v35
    %v37 = vrot.slane %v30, %v36
    %v39 = vmul.f32 %v24, %v37
    %v40 = vmul.f32 %v25, %v37
    %41 = vst [vmem:[#allocation5] sm:$0xff] %v39
    %42 = vst [vmem:[#allocation5 + $0x8] sm:$0xff] %v40
    // Predicated region
    $region14: #{tpu_custom_call.1} parent=1 // pred_check
      _
    $region15: #{tpu_custom_call.1} parent=1 // pred_check_branch
      %44 = sbr.rel (0) target = $region17
    $region16: #{tpu_custom_call.1} parent=1 // pred_region
      %s46 = ssub.s32 256, 256
      %47 = vsyncadd [#allocation4], %s46
      %s49 = sshll.u32 [#allocation5], 4
      %s50 = int_to_ptr.vmem [resolvable:$true] %s49
      %52 = dma.vmem_to_hbm [thread:$0]  %s50, 256, %s2, [#allocation4]
    $region17: #{tpu_custom_call.1} parent=1 // pred_fallthru
      _
    // Predicated region
    $region18: #{tpu_custom_call.1} parent=1 // pred_check
      _
    $region19: #{tpu_custom_call.1} parent=1 // pred_check_branch
      %54 = sbr.rel (0) target = $region21
    $region20: #{tpu_custom_call.1} parent=1 // pred_region
      %55 = dma.done [#allocation4], 256
    $region21: #{tpu_custom_call.1} parent=1 // pred_fallthru
      _
    %56 = vsyncpa [#allocation3], 1
    %57 = vsyncpa [#allocation4], 1

</llo_original>
